<compile_context>
chip_gen: v7x
topology: tpu7x:2x2x1
jax: 0.10.0
libtpu: 0.0.40
codegen_flags: <defaults>
</compile_context>

<pallas_src>
import math

import jax
import jax.numpy as jnp
from jax.experimental import pallas as pl
from jax.experimental.pallas import tpu as pltpu

LN_EPS = 1e-5
LANE = 128


def _round_up(x, m):
    return (x + m - 1) // m * m


# --------------------------- adjacency builder -------------------------------

def _normalized_adjacency(edge_index, num_nodes, n_pad=None,
                          dtype=jnp.bfloat16):
    """D^{-1/2} (A + I) D^{-1/2}, built directly at padded shape in `dtype`.

    Degrees come from a segment-sum over edges and the D^{-1/2} scaling is
    folded into the scattered values, so the only N_pad^2 HBM pass in the
    wrapper is the scatter itself (no f32 materialize + pad + cast chain).
    """
    if n_pad is None:
        n_pad = num_nodes
    loop = jnp.arange(num_nodes, dtype=edge_index.dtype)
    src = jnp.concatenate([edge_index[0], loop])
    dst = jnp.concatenate([edge_index[1], loop])
    deg = jnp.zeros((num_nodes,), jnp.float32).at[dst].add(1.0)
    dinv = jnp.where(deg > 0, jax.lax.rsqrt(deg), 0.0)
    vals = (dinv[dst] * dinv[src]).astype(dtype)
    return jnp.zeros((n_pad, n_pad), dtype).at[dst, src].add(vals)
    # TODO(synk): fp8 (e4m3) adjacency on v7x / int8 on v5e-v6e would halve
    # the dominant N^2 bytes again; needs accuracy validation first.


# ---- kernel 1: z2 = ( relu(LayerNorm(adj @ xw + b1)) ) @ W2  (bf16 out) -----

def _make_gcn1_kernel(h_true, h_pad, nt_k, resident_rhs):
    inv_h = 1.0 / float(h_true)
    masked = h_pad != h_true

    def kernel(adj_ref, xw_ref, params_ref, w2_ref, z2_ref, acc_ref):
        k = pl.program_id(1)

        @pl.when(k == 0)
        def _():
            acc_ref[...] = jnp.zeros_like(acc_ref)

        if resident_rhs:
            ks = pl.multiple_of(k * nt_k, nt_k)
            rhs = xw_ref[pl.ds(ks, nt_k), :]
        else:
            rhs = xw_ref[...]
        acc_ref[...] += jnp.dot(adj_ref[...], rhs,
                                preferred_element_type=jnp.float32)

        @pl.when(k == pl.num_programs(1) - 1)
        def _():
            b1 = params_ref[0:1, :]
            gamma = params_ref[1:2, :]
            beta = params_ref[2:3, :]
            hv = acc_ref[...] + b1
            if masked:
                lane = jax.lax.broadcasted_iota(jnp.int32, hv.shape, 1)
                valid = lane < h_true
                hv = jnp.where(valid, hv, 0.0)
            # LayerNorm over the hidden dim, centered two-pass variance
            # (runs once per row tile -> essentially free, numerically safe).
            mean = jnp.sum(hv, axis=-1, keepdims=True) * inv_h
            d = hv - mean
            if masked:
                d = jnp.where(valid, d, 0.0)
            var = jnp.sum(d * d, axis=-1, keepdims=True) * inv_h
            hn = d * jax.lax.rsqrt(var + LN_EPS)
            hn = hn * gamma + beta
            hn = jnp.maximum(hn, 0.0)
            if masked:
                hn = jnp.where(valid, hn, 0.0)
            # TODO(synk): dropout implemented as identity (inference mode).
            z2_ref[...] = jnp.dot(hn.astype(jnp.bfloat16), w2_ref[...],
                                  preferred_element_type=jnp.float32
                                  ).astype(jnp.bfloat16)

    return kernel


# ---- kernel 2: out = relu(adj @ z2 + b2) * size_factor  (f32 out) -----------

def _make_gcn2_kernel(nt_k, resident_rhs):
    def kernel(adj_ref, z_ref, b2_ref, sf_ref, out_ref, acc_ref):
        k = pl.program_id(1)

        @pl.when(k == 0)
        def _():
            acc_ref[...] = jnp.zeros_like(acc_ref)

        if resident_rhs:
            ks = pl.multiple_of(k * nt_k, nt_k)
            rhs = z_ref[pl.ds(ks, nt_k), :]
        else:
            rhs = z_ref[...]
        acc_ref[...] += jnp.dot(adj_ref[...], rhs,
                                preferred_element_type=jnp.float32)

        @pl.when(k == pl.num_programs(1) - 1)
        def _():
            y = jnp.maximum(acc_ref[...] + b2_ref[...], 0.0)
            out_ref[...] = y * sf_ref[...]     # (nt_m, 1) broadcast per node

    return kernel


# ------------------------------ wrapper --------------------------------------

def gae_forward(x, edge_index, w1, b1, ln_g, ln_b, w2, b2, size_factors=1.0,
                row_tile=512, k_tile=2048, resident_rhs=None,
                vmem_limit_bytes=64 * 1024 * 1024):
    """GAE forward.  size_factors may be a scalar or per-node array.

    Tuning notes: keep row_tile at 512-1024 (epilogue vreg pressure) and put
    extra bytes into k_tile.  On v7x use ~2x the v6e tiles, cap
    vmem_limit_bytes around ~48 MiB (64 MiB physical VMEM per TC), and keep
    n_pad // row_tile >= 2 so the "parallel" row axis feeds both TensorCores.
    """
    n, f_in = x.shape
    hdim = w1.shape[1]
    f_out = w2.shape[1]
    assert row_tile % 128 == 0 and k_tile % 128 == 0

    f_in_pad = _round_up(f_in, LANE)
    h_pad = _round_up(hdim, LANE)
    f_out_pad = _round_up(f_out, LANE)

    n128 = _round_up(n, LANE)
    nt_m = min(row_tile, n128)
    nt_k = min(k_tile, n128)
    n_pad = _round_up(n, math.lcm(nt_m, nt_k))
    grid = (n_pad // nt_m, n_pad // nt_k)

    if resident_rhs is None:
        # Whole bf16 xw / z2 slab (double-buffered) must leave plenty of room
        # for the large adjacency tiles; otherwise stream it per k tile.
        slab_bytes = 2 * 2 * n_pad * max(h_pad, f_out_pad)
        resident_rhs = slab_bytes <= vmem_limit_bytes // 4

    # Normalized adjacency built directly at padded shape in bf16.
    adj_bf = _normalized_adjacency(edge_index, n, n_pad=n_pad,
                                   dtype=jnp.bfloat16)

    # Small, lane-dense padded operands (zeros in the padding).
    x_p = jnp.zeros((n_pad, f_in_pad), jnp.float32).at[:n, :f_in].set(x)
    w1_p = jnp.zeros((f_in_pad, h_pad), jnp.float32).at[:f_in, :hdim].set(w1)
    w2_p = jnp.zeros((h_pad, f_out_pad), jnp.float32).at[:hdim, :f_out].set(w2)
    # b1 / gamma / beta packed into one (8, h_pad) operand.
    params = (jnp.zeros((8, h_pad), jnp.float32)
              .at[0, :hdim].set(b1)
              .at[1, :hdim].set(ln_g)
              .at[2, :hdim].set(ln_b))
    b2_p = jnp.zeros((1, f_out_pad), jnp.float32).at[0, :f_out].set(b2)

    # size_factors: scalar or per-node -> (n_pad, 1) f32, row-tiled.
    sf = jnp.broadcast_to(
        jnp.asarray(size_factors, jnp.float32).reshape(-1), (n,))
    sf_p = jnp.zeros((n_pad, 1), jnp.float32).at[:n, 0].set(sf)

    # Hoisted feature transform of layer 1 (O(N*F*H), tiny vs O(N^2*H)).
    xw_bf = jnp.dot(x_p, w1_p,
                    preferred_element_type=jnp.float32).astype(jnp.bfloat16)
    w2_bf = w2_p.astype(jnp.bfloat16)

    cparams = pltpu.CompilerParams(
        dimension_semantics=("parallel", "arbitrary"),
        vmem_limit_bytes=vmem_limit_bytes,
    )

    refetch = 1 if resident_rhs else grid[0]
    cost1 = pl.CostEstimate(
        flops=2 * n_pad * n_pad * h_pad + 2 * n_pad * h_pad * f_out_pad
        + 10 * n_pad * h_pad,
        transcendentals=n_pad,
        bytes_accessed=2 * n_pad * n_pad + 2 * n_pad * h_pad * refetch
        + 2 * h_pad * f_out_pad + 2 * n_pad * f_out_pad + 4 * 8 * h_pad,
    )
    cost2 = pl.CostEstimate(
        flops=2 * n_pad * n_pad * f_out_pad + 3 * n_pad * f_out_pad,
        transcendentals=0,
        bytes_accessed=2 * n_pad * n_pad + 2 * n_pad * f_out_pad * refetch
        + 4 * n_pad * f_out_pad + 4 * f_out_pad + 4 * n_pad,
    )

    if resident_rhs:
        xw_spec = pl.BlockSpec((n_pad, h_pad), lambda i, k: (0, 0))
        z_spec = pl.BlockSpec((n_pad, f_out_pad), lambda i, k: (0, 0))
    else:
        xw_spec = pl.BlockSpec((nt_k, h_pad), lambda i, k: (k, 0))
        z_spec = pl.BlockSpec((nt_k, f_out_pad), lambda i, k: (k, 0))

    # ---- layer 1 (propagate + LN + ReLU + fused W2 transform) ----
    z2 = pl.pallas_call(
        _make_gcn1_kernel(hdim, h_pad, nt_k, resident_rhs),
        out_shape=jax.ShapeDtypeStruct((n_pad, f_out_pad), jnp.bfloat16),
        grid_spec=pltpu.PrefetchScalarGridSpec(
            num_scalar_prefetch=0,
            grid=grid,
            in_specs=[
                pl.BlockSpec((nt_m, nt_k), lambda i, k: (i, k)),         # adj
                xw_spec,                                                 # x@W1
                pl.BlockSpec((8, h_pad), lambda i, k: (0, 0)),           # LN
                pl.BlockSpec((h_pad, f_out_pad), lambda i, k: (0, 0)),   # W2
            ],
            out_specs=pl.BlockSpec((nt_m, f_out_pad), lambda i, k: (i, 0)),
            scratch_shapes=[pltpu.VMEM((nt_m, h_pad), jnp.float32)],
        ),
        compiler_params=cparams,
        cost_estimate=cost1,
    )(adj_bf, xw_bf, params, w2_bf)

    # ---- layer 2 (propagate + bias + ReLU + size-factor scale) ----
    out_p = pl.pallas_call(
        _make_gcn2_kernel(nt_k, resident_rhs),
        out_shape=jax.ShapeDtypeStruct((n_pad, f_out_pad), jnp.float32),
        grid_spec=pltpu.PrefetchScalarGridSpec(
            num_scalar_prefetch=0,
            grid=grid,
            in_specs=[
                pl.BlockSpec((nt_m, nt_k), lambda i, k: (i, k)),         # adj
                z_spec,                                                  # h@W2
                pl.BlockSpec((1, f_out_pad), lambda i, k: (0, 0)),       # b2
                pl.BlockSpec((nt_m, 1), lambda i, k: (i, 0)),            # sf
            ],
            out_specs=pl.BlockSpec((nt_m, f_out_pad), lambda i, k: (i, 0)),
            scratch_shapes=[pltpu.VMEM((nt_m, f_out_pad), jnp.float32)],
        ),
        compiler_params=cparams,
        cost_estimate=cost2,
    )(adj_bf, z2, b2_p, sf_p)

    return out_p[:n, :f_out]


# ----------------------------- reference / demo ------------------------------

def glorot(key, shape):
    fan_in, fan_out = shape
    limit = jnp.sqrt(6.0 / (fan_in + fan_out))
    return jax.random.uniform(key, shape, jnp.float32, -limit, limit)


def reference_forward(adj, x, w1, b1, g, beta, w2, b2, sf):
    h = adj @ (x @ w1) + b1
    mu = h.mean(-1, keepdims=True)
    var = ((h - mu) ** 2).mean(-1, keepdims=True)
    h = (h - mu) / jnp.sqrt(var + LN_EPS) * g + beta
    h = jnp.maximum(h, 0.0)
    y = adj @ (h @ w2) + b2
    return jnp.maximum(y, 0.0) * sf


if __name__ == "__main__":
    key = jax.random.PRNGKey(0)
    N, F, H, E = 200, 32, 128, 600      # nodes, in-features, hidden_dim, edges

    keys = jax.random.split(key, 9)
    k_x, k_e1, k_e2, k_w1, k_w2, k_b1, k_lb, k_b2, k_sf = keys

    x = jax.random.normal(k_x, (N, F), jnp.float32)
    edge_index = jnp.stack([
        jax.random.randint(k_e1, (E,), 0, N),
        jax.random.randint(k_e2, (E,), 0, N),
    ]).astype(jnp.int32)

    w1 = glorot(k_w1, (F, H))
    b1 = 0.1 * jax.random.normal(k_b1, (H,), jnp.float32)
    ln_g = jnp.ones((H,), jnp.float32)
    ln_b = 0.1 * jax.random.normal(k_lb, (H,), jnp.float32)
    w2 = glorot(k_w2, (H, F))
    b2 = 0.1 * jax.random.normal(k_b2, (F,), jnp.float32)

    # Per-node size factors (exercises the (nt_m, 1) row-tiled VMEM block).
    size_factors = jax.random.uniform(k_sf, (N, 1), jnp.float32, 0.5, 1.5)

    # Small tiles so the demo exercises a real (2, 2) grid (parallel row axis
    # + k-accumulation + resident rhs); production defaults are 512 x 2048.
    out = gae_forward(x, edge_index, w1, b1, ln_g, ln_b, w2, b2, size_factors,
                      row_tile=128, k_tile=128)
    out = jax.block_until_ready(out)

    adj_ref = _normalized_adjacency(edge_index, N, dtype=jnp.float32)
    ref = reference_forward(adj_ref, x, w1, b1, ln_g, ln_b, w2, b2,
                            size_factors)
    assert out.shape == (N, F)
    # bf16 adjacency / matmul operands (f32 accumulation) -> loose tolerance.
    assert jnp.allclose(out, ref, atol=5e-2, rtol=5e-2), float(
        jnp.max(jnp.abs(out - ref)))
    print("KERNEL_OK")
</pallas_src>

<mosaic_0001>
module attributes {stable_mosaic.version = 11 : i64} {
  func.func @kernel(%arg0: i32, %arg1: i32, %arg2: memref<128x128xbf16, #tpu.memory_space<vmem>>, %arg3: memref<256x128xbf16, #tpu.memory_space<vmem>>, %arg4: memref<8x128xf32, #tpu.memory_space<vmem>>, %arg5: memref<128x128xbf16, #tpu.memory_space<vmem>>, %arg6: memref<128x128xbf16, #tpu.memory_space<vmem>>, %arg7: memref<128x128xf32, #tpu.memory_space<vmem>>) attributes {dimension_semantics = [#tpu.dimension_semantics<parallel>, #tpu.dimension_semantics<arbitrary>], iteration_bounds = array<i64: 2, 2>, scalar_prefetch = 0 : i64, scratch_operands = 1 : i64, tpu.core_type = #tpu.core_type<tc>, window_params = [{transform_indices = @transform_0, window_bounds = array<i64: 128, 128>}, {pipeline_mode = #tpu.pipeline_mode<synchronous>, transform_indices = @transform_1, window_bounds = array<i64: 256, 128>}, {pipeline_mode = #tpu.pipeline_mode<synchronous>, transform_indices = @transform_2, window_bounds = array<i64: 8, 128>}, {pipeline_mode = #tpu.pipeline_mode<synchronous>, transform_indices = @transform_3, window_bounds = array<i64: 128, 128>}, {transform_indices = @transform_4, window_bounds = array<i64: 128, 128>}]} {
    %c0_i32 = arith.constant 0 : i32
    %0 = arith.cmpi eq, %arg1, %c0_i32 : i32
    %1 = arith.extui %0 : i1 to i32
    %c0_i32_0 = arith.constant 0 : i32
    %2 = arith.cmpi ne, %1, %c0_i32_0 : i32
    scf.if %2 {
      %cst_8 = arith.constant 0.000000e+00 : f32
      %15 = vector.broadcast %cst_8 : f32 to vector<128x128xf32>
      %c0_9 = arith.constant 0 : index
      %c0_10 = arith.constant 0 : index
      %16 = vector.load %arg7[%c0_9, %c0_10] : memref<128x128xf32, #tpu.memory_space<vmem>>, vector<128x128xf32>
      tpu.vector_store %arg7[%c0_9, %c0_10], %15 {strides = array<i32>} : memref<128x128xf32, #tpu.memory_space<vmem>>, vector<128x128xf32>,
    } else {
    }
    %c128_i32 = arith.constant 128 : i32
    %3 = arith.muli %arg1, %c128_i32 : i32
    %4 = tpu.assume_multiple %3, 128 : i32
    %5 = arith.index_cast %4 : i32 to index
    %c0 = arith.constant 0 : index
    %6 = vector.load %arg3[%5, %c0] : memref<256x128xbf16, #tpu.memory_space<vmem>>, vector<128x128xbf16>
    %c0_1 = arith.constant 0 : index
    %c0_2 = arith.constant 0 : index
    %7 = vector.load %arg7[%c0_1, %c0_2] : memref<128x128xf32, #tpu.memory_space<vmem>>, vector<128x128xf32>
    %c0_3 = arith.constant 0 : index
    %c0_4 = arith.constant 0 : index
    %8 = vector.load %arg2[%c0_3, %c0_4] : memref<128x128xbf16, #tpu.memory_space<vmem>>, vector<128x128xbf16>
    %cst = arith.constant dense<0.000000e+00> : vector<128x128xf32>
    %9 = tpu.matmul %8, %6, %cst {dimension_numbers = #tpu.dot_dimension_numbers<[1], [0], [0], [1], [0, 0, 1, 1], [], []>} : vector<128x128xbf16>, vector<128x128xbf16>, vector<128x128xf32> -> vector<128x128xf32>
    %10 = arith.addf %7, %9 : vector<128x128xf32>
    %c0_5 = arith.constant 0 : index
    %c0_6 = arith.constant 0 : index
    %11 = vector.load %arg7[%c0_5, %c0_6] : memref<128x128xf32, #tpu.memory_space<vmem>>, vector<128x128xf32>
    tpu.vector_store %arg7[%c0_5, %c0_6], %10 {strides = array<i32>} : memref<128x128xf32, #tpu.memory_space<vmem>>, vector<128x128xf32>,
    %c1_i32 = arith.constant 1 : i32
    %12 = arith.cmpi eq, %arg1, %c1_i32 : i32
    %13 = arith.extui %12 : i1 to i32
    %c0_i32_7 = arith.constant 0 : i32
    %14 = arith.cmpi ne, %13, %c0_i32_7 : i32
    scf.if %14 {
      %c0_8 = arith.constant 0 : index
      %c0_9 = arith.constant 0 : index
      %15 = vector.load %arg4[%c0_8, %c0_9] : memref<8x128xf32, #tpu.memory_space<vmem>>, vector<1x128xf32>
      %c1 = arith.constant 1 : index
      %c0_10 = arith.constant 0 : index
      %16 = vector.load %arg4[%c1, %c0_10] : memref<8x128xf32, #tpu.memory_space<vmem>>, vector<1x128xf32>
      %c2 = arith.constant 2 : index
      %c0_11 = arith.constant 0 : index
      %17 = vector.load %arg4[%c2, %c0_11] : memref<8x128xf32, #tpu.memory_space<vmem>>, vector<1x128xf32>
      %c0_12 = arith.constant 0 : index
      %c0_13 = arith.constant 0 : index
      %18 = vector.load %arg7[%c0_12, %c0_13] : memref<128x128xf32, #tpu.memory_space<vmem>>, vector<128x128xf32>
      %19 = vector.broadcast %15 : vector<1x128xf32> to vector<128x128xf32>
      %20 = arith.addf %18, %19 : vector<128x128xf32>
      %cst_14 = arith.constant dense<0.000000e+00> : vector<128xf32>
      %21 = vector.multi_reduction <add>, %20, %cst_14 [1] : vector<128x128xf32> to vector<128xf32>
      %22 = vector.shape_cast %21 : vector<128xf32> to vector<128x1xf32>
      %cst_15 = arith.constant 7.812500e-03 : f32
      %23 = vector.broadcast %cst_15 : f32 to vector<128x1xf32>
      %24 = arith.mulf %22, %23 : vector<128x1xf32>
      %25 = vector.broadcast %24 : vector<128x1xf32> to vector<128x128xf32>
      %26 = arith.subf %20, %25 : vector<128x128xf32>
      %27 = arith.mulf %26, %26 : vector<128x128xf32>
      %cst_16 = arith.constant dense<0.000000e+00> : vector<128xf32>
      %28 = vector.multi_reduction <add>, %27, %cst_16 [1] : vector<128x128xf32> to vector<128xf32>
      %29 = vector.shape_cast %28 : vector<128xf32> to vector<128x1xf32>
      %cst_17 = arith.constant 7.812500e-03 : f32
      %30 = vector.broadcast %cst_17 : f32 to vector<128x1xf32>
      %31 = arith.mulf %29, %30 : vector<128x1xf32>
      %cst_18 = arith.constant 9.99999974E-6 : f32
      %32 = vector.broadcast %cst_18 : f32 to vector<128x1xf32>
      %33 = arith.addf %31, %32 : vector<128x1xf32>
      %34 = math.rsqrt %33 : vector<128x1xf32>
      %35 = vector.broadcast %34 : vector<128x1xf32> to vector<128x128xf32>
      %36 = arith.mulf %26, %35 : vector<128x128xf32>
      %37 = vector.broadcast %16 : vector<1x128xf32> to vector<128x128xf32>
      %38 = arith.mulf %36, %37 : vector<128x128xf32>
      %39 = vector.broadcast %17 : vector<1x128xf32> to vector<128x128xf32>
      %40 = arith.addf %38, %39 : vector<128x128xf32>
      %cst_19 = arith.constant 0.000000e+00 : f32
      %41 = vector.broadcast %cst_19 : f32 to vector<128x128xf32>
      %42 = arith.maximumf %40, %41 : vector<128x128xf32>
      %43 = arith.truncf %42 : vector<128x128xf32> to vector<128x128xbf16>
      %c0_20 = arith.constant 0 : index
      %c0_21 = arith.constant 0 : index
      %44 = vector.load %arg5[%c0_20, %c0_21] : memref<128x128xbf16, #tpu.memory_space<vmem>>, vector<128x128xbf16>
      %cst_22 = arith.constant dense<0.000000e+00> : vector<128x128xf32>
      %45 = tpu.matmul %43, %44, %cst_22 {dimension_numbers = #tpu.dot_dimension_numbers<[1], [0], [0], [1], [0, 0, 1, 1], [], []>} : vector<128x128xbf16>, vector<128x128xbf16>, vector<128x128xf32> -> vector<128x128xf32>
      %46 = arith.truncf %45 : vector<128x128xf32> to vector<128x128xbf16>
      %c0_23 = arith.constant 0 : index
      %c0_24 = arith.constant 0 : index
      %47 = vector.load %arg6[%c0_23, %c0_24] : memref<128x128xbf16, #tpu.memory_space<vmem>>, vector<128x128xbf16>
      tpu.vector_store %arg6[%c0_23, %c0_24], %46 {strides = array<i32>} : memref<128x128xbf16, #tpu.memory_space<vmem>>, vector<128x128xbf16>,
    } else {
    }
    return
  }
  func.func @transform_0(%arg0: i32, %arg1: i32) -> (i32, i32) {
    %c0_i32 = arith.constant 0 : i32
    return %arg0, %arg1 : i32, i32
  }
  func.func @transform_1(%arg0: i32, %arg1: i32) -> (i32, i32) {
    %c0_i32 = arith.constant 0 : i32
    %c0_i32_0 = arith.constant 0 : i32
    %c0_i32_1 = arith.constant 0 : i32
    return %c0_i32, %c0_i32_0 : i32, i32
  }
  func.func @transform_2(%arg0: i32, %arg1: i32) -> (i32, i32) {
    %c0_i32 = arith.constant 0 : i32
    %c0_i32_0 = arith.constant 0 : i32
    %c0_i32_1 = arith.constant 0 : i32
    return %c0_i32, %c0_i32_0 : i32, i32
  }
  func.func @transform_3(%arg0: i32, %arg1: i32) -> (i32, i32) {
    %c0_i32 = arith.constant 0 : i32
    %c0_i32_0 = arith.constant 0 : i32
    %c0_i32_1 = arith.constant 0 : i32
    return %c0_i32, %c0_i32_0 : i32, i32
  }
  func.func @transform_4(%arg0: i32, %arg1: i32) -> (i32, i32) {
    %c0_i32 = arith.constant 0 : i32
    %c0_i32_0 = arith.constant 0 : i32
    return %arg0, %c0_i32 : i32, i32
  }
}

</mosaic_0001>

<llo_original>
// kernel: tpu_custom_call.1
$region0: #{tpu_custom_call.1}
  #allocation0 [shape = 'u32[]', space=smem, size = 0x4, offset = 0x4, fixed_abs, tag = 'smem constant byte address 0x4 - core index']
  #allocation1 [shape = 'u32[144,128]{1,0:T(1,128)}', space=vmem, size = 0x12000, scoped, tag = 'internal scratch']
  #allocation2 [shape = 'f32[128,128]{1,0:T(8,128)}', space=vmem, size = 0x10000, scoped, tag = 'scratch operand']
  %s0 = inlined_call_operand.hbm [shape: bf16[256,256], index: 0, kind: input, shape index: {}]
  %s1 = inlined_call_operand.hbm [shape: bf16[256,128], index: 1, kind: input, shape index: {}]
  %s2 = inlined_call_operand.hbm [shape: f32[8,128], index: 2, kind: input, shape index: {}]
  %s3 = inlined_call_operand.hbm [shape: bf16[128,128], index: 3, kind: input, shape index: {}]
  %s4 = inlined_call_operand.hbm [shape: bf16[256,128], index: 4, kind: output, shape index: {}]
  %s5 = sld [smem:[#allocation0]]
  $region73: #{tpu_custom_call.1} parent=0
    _
  %s7 = ssub.s32 1, %s5
  %s8 = scalar_select 0, %s7, %s5
  $region1: #{tpu_custom_call.1} parent=0
    #allocation3 [shape = 'u8[65536]{0}', space=vmem, size = 0x10000, scoped, tag = 'input window, operand 0']
    #allocation4 [shape = 's32[2]{0}', space=sflag, size = 0x8, scoped, tag = 'scoped memory for tpu_custom_call.1']
    #allocation5 [shape = 's32[2]{0}', space=sflag, size = 0x8, scoped, tag = 'scoped memory for tpu_custom_call.1']
    #allocation6 [shape = 'u8[65536]{0}', space=vmem, size = 0x10000, scoped, tag = 'input window, operand 1, single buffered']
    #allocation7 [shape = 's32[1]{0}', space=sflag, size = 0x4, scoped, tag = 'scoped memory for tpu_custom_call.1']
    #allocation8 [shape = 'u8[4096]{0}', space=vmem, size = 0x1000, scoped, tag = 'input window, operand 2, single buffered']
    #allocation9 [shape = 'u8[32768]{0}', space=vmem, size = 0x8000, scoped, tag = 'input window, operand 3, single buffered']
    #allocation10 [shape = 's32[1]{0}', space=sflag, size = 0x4, scoped, tag = 'scoped memory for tpu_custom_call.1']
    #allocation11 [shape = 'u8[65536]{0}', space=vmem, size = 0x10000, scoped, tag = 'output window, operand 0']
    %9 = vsyncpa [#allocation4], 0
    %s10 = scalar_lea.sflag [#allocation4], 1
    %11 = vsyncpa %s10, 0
    %12 = vsyncpa [#allocation7], 0
    %13 = vsyncpa [#allocation10], 0
    %14 = vsyncpa [#allocation5], 0
    %s15 = scalar_lea.sflag [#allocation5], 1
    %16 = vsyncpa %s15, 0
    loop: start=0, step=1, limit=6
    $region2: #{tpu_custom_call.1} parent=1 // loop_pre_header
      _
    $region3: #{tpu_custom_call.1} parent=1 // loop_header
      %s18 = sphi 0, %s22
      %p19 = scmp.ge.s32.totalorder %s18, 6
      %s25 = sphi 0, %s37
      %s26 = sphi 0, %s33
      %s27 = sphi 0, %s25
      %s28 = sphi 0, %s26
      %s29 = sphi 0, %s27
      %s30 = sphi 0, %s28
      %s42 = sphi 0, %s44
      %s45 = sphi 0, %s42
      %s46 = sphi 0, %s45
      %s62 = sphi 0, %s46
      %s66 = sphi 0, %s66
      %s68 = sphi 0, %s66
      %s69 = sphi 0, %s68
      %s83 = sphi 0, %s69
      %s87 = sphi 0, %s87
      %s89 = sphi 0, %s87
      %s90 = sphi 0, %s89
      %s104 = sphi 0, %s90
      %s108 = sphi 0, %s108
      %s110 = sphi 0, %s108
      %s111 = sphi 0, %s110
      %s125 = sphi 0, %s111
      %s131 = sphi 0, %s133
      %s134 = sphi 0, %s131
      %s135 = sphi 0, %s134
      %s151 = sphi 0, %s135
    $region4: #{tpu_custom_call.1} parent=1 // loop_header_branch
      %21 = sbr.rel (%p19) target = $region8
    $region5: #{tpu_custom_call.1} parent=1 // loop_body
      %s23 = ssub.s32 %s18, 1
      %s24 = ssub.s32 %s18, 2
      %s31 = sadd.s32 1, %s26
      %p32 = scmp.ge.s32.totalorder %s31, 2
      %s33 = scalar_select %p32, 0, %s31
      %s34 = sadd.s32 1, %s25
      %s35 = scalar_select %p32, %s34, %s25
      %p36 = scmp.ge.s32.totalorder %s35, 2
      %s37 = scalar_select %p36, 0, %s35
      %s38 = ssub.s32 %s25, %s37
      %s39 = ssub.s32 %s26, %s33
      %s40 = sor.u32 %s38, %s39
      %p41 = scmp.eq.s32.totalorder %s40, 0
      %s43 = sadd.s32 %s42, 1
      %s44 = scalar_select %p41, %s42, %s43
      %p47 = pneg %p41
      %p48 = scmp.eq.s32.totalorder %s18, 3
      %p49 = por %p47, %p48
      %p50 = scmp.ne.s32.totalorder %s42, %s45
      %p51 = scmp.eq.s32.totalorder %s18, 0
      %p52 = por %p50, %p51
      %p53 = scmp.ne.s32.totalorder %s42, %s45
      %p54 = scmp.eq.s32.totalorder %s23, 3
      %p55 = por %p53, %p54
      %p56 = scmp.ne.s32.totalorder %s45, %s46
      %p57 = scmp.eq.s32.totalorder %s23, 0
      %p58 = por %p56, %p57
      %p59 = scmp.ne.s32.totalorder %s45, %s46
      %p60 = scmp.eq.s32.totalorder %s24, 3
      %p61 = por %p59, %p60
      %p63 = scmp.ne.s32.totalorder %s46, %s62
      %p64 = scmp.eq.s32.totalorder %s24, 0
      %p65 = por %p63, %p64
      %s67 = sadd.s32 %s66, 1
      %p70 = scmp.eq.s32.totalorder %s18, 3
      %p71 = scmp.ne.s32.totalorder %s66, %s68
      %p72 = scmp.eq.s32.totalorder %s18, 0
      %p73 = por %p71, %p72
      %p74 = scmp.ne.s32.totalorder %s66, %s68
      %p75 = scmp.eq.s32.totalorder %s23, 3
      %p76 = por %p74, %p75
      %p77 = scmp.ne.s32.totalorder %s68, %s69
      %p78 = scmp.eq.s32.totalorder %s23, 0
      %p79 = por %p77, %p78
      %p80 = scmp.ne.s32.totalorder %s68, %s69
      %p81 = scmp.eq.s32.totalorder %s24, 3
      %p82 = por %p80, %p81
      %p84 = scmp.ne.s32.totalorder %s69, %s83
      %p85 = scmp.eq.s32.totalorder %s24, 0
      %p86 = por %p84, %p85
      %s88 = sadd.s32 %s87, 1
      %p91 = scmp.eq.s32.totalorder %s18, 3
      %p92 = scmp.ne.s32.totalorder %s87, %s89
      %p93 = scmp.eq.s32.totalorder %s18, 0
      %p94 = por %p92, %p93
      %p95 = scmp.ne.s32.totalorder %s87, %s89
      %p96 = scmp.eq.s32.totalorder %s23, 3
      %p97 = por %p95, %p96
      %p98 = scmp.ne.s32.totalorder %s89, %s90
      %p99 = scmp.eq.s32.totalorder %s23, 0
      %p100 = por %p98, %p99
      %p101 = scmp.ne.s32.totalorder %s89, %s90
      %p102 = scmp.eq.s32.totalorder %s24, 3
      %p103 = por %p101, %p102
      %p105 = scmp.ne.s32.totalorder %s90, %s104
      %p106 = scmp.eq.s32.totalorder %s24, 0
      %p107 = por %p105, %p106
      %s109 = sadd.s32 %s108, 1
      %p112 = scmp.eq.s32.totalorder %s18, 3
      %p113 = scmp.ne.s32.totalorder %s108, %s110
      %p114 = scmp.eq.s32.totalorder %s18, 0
      %p115 = por %p113, %p114
      %p116 = scmp.ne.s32.totalorder %s108, %s110
      %p117 = scmp.eq.s32.totalorder %s23, 3
      %p118 = por %p116, %p117
      %p119 = scmp.ne.s32.totalorder %s110, %s111
      %p120 = scmp.eq.s32.totalorder %s23, 0
      %p121 = por %p119, %p120
      %p122 = scmp.ne.s32.totalorder %s110, %s111
      %p123 = scmp.eq.s32.totalorder %s24, 3
      %p124 = por %p122, %p123
      %p126 = scmp.ne.s32.totalorder %s111, %s125
      %p127 = scmp.eq.s32.totalorder %s24, 0
      %p128 = por %p126, %p127
      %s129 = ssub.s32 %s25, %s37
      %p130 = scmp.eq.s32.totalorder %s129, 0
      %s132 = sadd.s32 %s131, 1
      %s133 = scalar_select %p130, %s131, %s132
      %p136 = pneg %p130
      %p137 = scmp.eq.s32.totalorder %s18, 3
      %p138 = por %p136, %p137
      %p139 = scmp.ne.s32.totalorder %s131, %s134
      %p140 = scmp.eq.s32.totalorder %s18, 0
      %p141 = por %p139, %p140
      %p142 = scmp.ne.s32.totalorder %s131, %s134
      %p143 = scmp.eq.s32.totalorder %s23, 3
      %p144 = por %p142, %p143
      %p145 = scmp.ne.s32.totalorder %s134, %s135
      %p146 = scmp.eq.s32.totalorder %s23, 0
      %p147 = por %p145, %p146
      %p148 = scmp.ne.s32.totalorder %s134, %s135
      %p149 = scmp.eq.s32.totalorder %s24, 3
      %p150 = por %p148, %p149
      %p152 = scmp.ne.s32.totalorder %s135, %s151
      %p153 = scmp.eq.s32.totalorder %s24, 0
      %p154 = por %p152, %p153
      %p155 = scmp.le.s32.totalorder 1, %s18
      %p156 = scmp.lt.s32.totalorder %s18, 5
      %p157 = pnand %p155, %p156
      %p158 = pneg %p157
      // Predicated region
      $region9: #{tpu_custom_call.1} parent=5 // pred_check
        _
      $region10: #{tpu_custom_call.1} parent=5 // pred_check_branch
        %160 = sbr.rel (%p157) target = $region12
      $region11: #{tpu_custom_call.1} parent=5 // pred_region
        %s161 = ssub.s32 %s18, 1
        // Predicated region
        $region13: #{tpu_custom_call.1} parent=11 // pred_check
          %p162 = pneg %p79
        $region14: #{tpu_custom_call.1} parent=11 // pred_check_branch
          %164 = sbr.rel (%p162) target = $region16
        $region15: #{tpu_custom_call.1} parent=11 // pred_region
          %s166 = ssub.s32 2048, 2048
          %167 = vsyncadd [#allocation7], %s166
          %s168 = sshll.u32 [#allocation6], 4
          %s169 = int_to_ptr.vmem [resolvable:$true] %s168
          %174 = dma.hbm_to_vmem [thread:$0]  %s1, 2048, %s169, [#allocation7], 64, 64, 4
        $region16: #{tpu_custom_call.1} parent=11 // pred_fallthru
          _
        // Predicated region
        $region17: #{tpu_custom_call.1} parent=11 // pred_check
          %p175 = pneg %p100
        $region18: #{tpu_custom_call.1} parent=11 // pred_check_branch
          %177 = sbr.rel (%p175) target = $region20
        $region19: #{tpu_custom_call.1} parent=11 // pred_region
          %s179 = ssub.s32 128, 128
          %180 = vsyncadd [#allocation7], %s179
          %s182 = sshll.u32 [#allocation8], 4
          %s183 = int_to_ptr.vmem [resolvable:$true] %s182
          %185 = dma.hbm_to_vmem [thread:$0]  %s2, 128, %s183, [#allocation7]
        $region20: #{tpu_custom_call.1} parent=11 // pred_fallthru
          _
        // Predicated region
        $region21: #{tpu_custom_call.1} parent=11 // pred_check
          %p186 = pneg %p121
        $region22: #{tpu_custom_call.1} parent=11 // pred_check_branch
          %188 = sbr.rel (%p186) target = $region24
        $region23: #{tpu_custom_call.1} parent=11 // pred_region
          %s190 = ssub.s32 1024, 1024
          %191 = vsyncadd [#allocation10], %s190
          %s192 = sshll.u32 [#allocation9], 4
          %s193 = int_to_ptr.vmem [resolvable:$true] %s192
          %198 = dma.hbm_to_vmem [thread:$0]  %s3, 1024, %s193, [#allocation10], 64, 64, 4
        $region24: #{tpu_custom_call.1} parent=11 // pred_fallthru
          _
      $region12: #{tpu_custom_call.1} parent=5 // pred_fallthru
        _
      %p199 = scmp.lt.s32.totalorder %s18, 4
      // Predicated region
      $region25: #{tpu_custom_call.1} parent=5 // pred_check
        %p200 = pneg %p199
      $region26: #{tpu_custom_call.1} parent=5 // pred_check_branch
        %202 = sbr.rel (%p200) target = $region28
      $region27: #{tpu_custom_call.1} parent=5 // pred_region
        // Predicated region
        $region29: #{tpu_custom_call.1} parent=27 // pred_check
          %p203 = pneg %p52
        $region30: #{tpu_custom_call.1} parent=27 // pred_check_branch
          %205 = sbr.rel (%p203) target = $region32
        $region31: #{tpu_custom_call.1} parent=27 // pred_region
          %s206 = sand.u32 %s42, 1
          %s207 = scalar_lea.sflag [#allocation4], %s206
          %s208 = sand.u32 %s42, 1
          %s209 = smul.addr %s208, 64
          %s210 = scalar_lea.vmem [#allocation3], %s209
          %s211 = smul.u32 16, %s25
          %s213 = ssub.s32 1024, 1024
          %214 = vsyncadd %s207, %s213
          %s215 = smul.addr %s211, 2
          %s216 = sadd.s32 %s26, %s215
          %s217 = smul.addr %s216, 64
          %s218 = scalar_lea.hbm %s0, %s217
          %s219 = sshll.u32 %s210, 4
          %s220 = int_to_ptr.vmem [resolvable:$true] %s219
          %225 = dma.hbm_to_vmem [thread:$0]  %s218, 1024, %s220, %s207, 128, 64, 4
        $region32: #{tpu_custom_call.1} parent=27 // pred_fallthru
          _
      $region28: #{tpu_custom_call.1} parent=5 // pred_fallthru
        _
      %p226 = scmp.le.s32.totalorder 1, %s18
      %p227 = scmp.lt.s32.totalorder %s18, 5
      %p228 = pnand %p226, %p227
      %p229 = pneg %p228
      // Predicated region
      $region33: #{tpu_custom_call.1} parent=5 // pred_check
        _
      $region34: #{tpu_custom_call.1} parent=5 // pred_check_branch
        %231 = sbr.rel (%p228) target = $region36
      $region35: #{tpu_custom_call.1} parent=5 // pred_region
        %s232 = ssub.s32 %s18, 1
        %s233 = sand.u32 %s45, 1
        %s234 = scalar_lea.sflag [#allocation4], %s233
        %s235 = sand.u32 %s45, 1
        %s236 = smul.addr %s235, 64
        %s237 = scalar_lea.vmem [#allocation3], %s236
        // Predicated region
        $region37: #{tpu_custom_call.1} parent=35 // pred_check
          %p238 = pneg %p58
        $region38: #{tpu_custom_call.1} parent=35 // pred_check_branch
          %240 = sbr.rel (%p238) target = $region40
        $region39: #{tpu_custom_call.1} parent=35 // pred_region
          %241 = dma.done %s234, 1024
        $region40: #{tpu_custom_call.1} parent=35 // pred_fallthru
          _
        // Predicated region
        $region41: #{tpu_custom_call.1} parent=35 // pred_check
          %p242 = pneg %p79
        $region42: #{tpu_custom_call.1} parent=35 // pred_check_branch
          %244 = sbr.rel (%p242) target = $region44
        $region43: #{tpu_custom_call.1} parent=35 // pred_region
          %245 = dma.done [#allocation7], 2048
        $region44: #{tpu_custom_call.1} parent=35 // pred_fallthru
          _
        // Predicated region
        $region45: #{tpu_custom_call.1} parent=35 // pred_check
          %p246 = pneg %p100
        $region46: #{tpu_custom_call.1} parent=35 // pred_check_branch
          %248 = sbr.rel (%p246) target = $region48
        $region47: #{tpu_custom_call.1} parent=35 // pred_region
          %249 = dma.done [#allocation7], 128
        $region48: #{tpu_custom_call.1} parent=35 // pred_fallthru
          _
        // Predicated region
        $region49: #{tpu_custom_call.1} parent=35 // pred_check
          %p250 = pneg %p121
        $region50: #{tpu_custom_call.1} parent=35 // pred_check_branch
          %252 = sbr.rel (%p250) target = $region52
        $region51: #{tpu_custom_call.1} parent=35 // pred_region
          %253 = dma.done [#allocation10], 1024
        $region52: #{tpu_custom_call.1} parent=35 // pred_fallthru
          _
        %s254 = sand.u32 %s45, 1
        %s255 = scalar_lea.sflag [#allocation4], %s254
        %s256 = sand.u32 %s45, 1
        %s257 = smul.addr %s256, 64
        %s258 = scalar_lea.vmem [#allocation3], %s257
        %p259 = pneg %p58
        %p260 = pneg %p55
        %p261 = pneg %p79
        %p262 = pneg %p76
        %p263 = pneg %p100
        %p264 = pneg %p97
        %p265 = pneg %p121
        %p266 = pneg %p118
        %p267 = pneg %p147
        %p268 = pneg %p144
        %s269 = sand.u32 %s134, 1
        %s270 = scalar_lea.sflag [#allocation5], %s269
        %s271 = sand.u32 %s134, 1
        %s272 = smul.addr %s271, 64
        %s273 = scalar_lea.vmem [#allocation11], %s272
        %s274 = smul.u32 16, %s27
        %s275 = smul.u32 16, %s27
        %p277 = scmp.eq.s32.totalorder %s28, 0
        // Predicated region
        $region53: #{tpu_custom_call.1} parent=35 // pred_check
          %p278 = pneg %p277
        $region54: #{tpu_custom_call.1} parent=35 // pred_check_branch
          %280 = sbr.rel (%p278) target = $region56
        $region55: #{tpu_custom_call.1} parent=35 // pred_region
          %281 = vst [vmem:[#allocation2] sm:$0xff] 0.0
          %282 = vst [vmem:[#allocation2 + $0x8] sm:$0xff] 0.0
          %283 = vst [vmem:[#allocation2 + $0x10] sm:$0xff] 0.0
          %284 = vst [vmem:[#allocation2 + $0x18] sm:$0xff] 0.0
          %285 = vst [vmem:[#allocation2 + $0x20] sm:$0xff] 0.0
          %286 = vst [vmem:[#allocation2 + $0x28] sm:$0xff] 0.0
          %287 = vst [vmem:[#allocation2 + $0x30] sm:$0xff] 0.0
          %288 = vst [vmem:[#allocation2 + $0x38] sm:$0xff] 0.0
          %289 = vst [vmem:[#allocation2 + $0x40] sm:$0xff] 0.0
          %290 = vst [vmem:[#allocation2 + $0x48] sm:$0xff] 0.0
          %291 = vst [vmem:[#allocation2 + $0x50] sm:$0xff] 0.0
          %292 = vst [vmem:[#allocation2 + $0x58] sm:$0xff] 0.0
          %293 = vst [vmem:[#allocation2 + $0x60] sm:$0xff] 0.0
          %294 = vst [vmem:[#allocation2 + $0x68] sm:$0xff] 0.0
          %295 = vst [vmem:[#allocation2 + $0x70] sm:$0xff] 0.0
          %296 = vst [vmem:[#allocation2 + $0x78] sm:$0xff] 0.0
        $region56: #{tpu_custom_call.1} parent=35 // pred_fallthru
          _
        %s297 = smul.u32 %s28, 128
        %s298 = sshra.s32 %s297, 3
        %s299 = sand.u32 %s297, 7
        %s300 = smul.addr %s298, 4
        %s301 = scalar_lea.vmem [#allocation6], %s300
        %v302 = vld [vmem:[%s301] sm:$0xf]
        %v303 = vld [vmem:[%s301 + $0x4] sm:$0xf]
        %v304 = vld [vmem:[%s301 + $0x8] sm:$0xf]
        %v305 = vld [vmem:[%s301 + $0xc] sm:$0xf]
        %v306 = vld [vmem:[%s301 + $0x10] sm:$0xf]
        %v307 = vld [vmem:[%s301 + $0x14] sm:$0xf]
        %v308 = vld [vmem:[%s301 + $0x18] sm:$0xf]
        %v309 = vld [vmem:[%s301 + $0x1c] sm:$0xf]
        %v310 = vld [vmem:[%s301 + $0x20] sm:$0xf]
        %v311 = vld [vmem:[%s301 + $0x24] sm:$0xf]
        %v312 = vld [vmem:[%s301 + $0x28] sm:$0xf]
        %v313 = vld [vmem:[%s301 + $0x2c] sm:$0xf]
        %v314 = vld [vmem:[%s301 + $0x30] sm:$0xf]
        %v315 = vld [vmem:[%s301 + $0x34] sm:$0xf]
        %v316 = vld [vmem:[%s301 + $0x38] sm:$0xf]
        %v317 = vld [vmem:[%s301 + $0x3c] sm:$0xf]
        %v318 = vld [vmem:[#allocation2] sm:$0xff]
        %v319 = vld [vmem:[#allocation2 + $0x8] sm:$0xff]
        %v320 = vld [vmem:[#allocation2 + $0x10] sm:$0xff]
        %v321 = vld [vmem:[#allocation2 + $0x18] sm:$0xff]
        %v322 = vld [vmem:[#allocation2 + $0x20] sm:$0xff]
        %v323 = vld [vmem:[#allocation2 + $0x28] sm:$0xff]
        %v324 = vld [vmem:[#allocation2 + $0x30] sm:$0xff]
        %v325 = vld [vmem:[#allocation2 + $0x38] sm:$0xff]
        %v326 = vld [vmem:[#allocation2 + $0x40] sm:$0xff]
        %v327 = vld [vmem:[#allocation2 + $0x48] sm:$0xff]
        %v328 = vld [vmem:[#allocation2 + $0x50] sm:$0xff]
        %v329 = vld [vmem:[#allocation2 + $0x58] sm:$0xff]
        %v330 = vld [vmem:[#allocation2 + $0x60] sm:$0xff]
        %v331 = vld [vmem:[#allocation2 + $0x68] sm:$0xff]
        %v332 = vld [vmem:[#allocation2 + $0x70] sm:$0xff]
        %v333 = vld [vmem:[#allocation2 + $0x78] sm:$0xff]
        %v334 = vld [vmem:[%s237] sm:$0xf]
        %v335 = vld [vmem:[%s237 + $0x4] sm:$0xf]
        %v336 = vld [vmem:[%s237 + $0x8] sm:$0xf]
        %v337 = vld [vmem:[%s237 + $0xc] sm:$0xf]
        %v338 = vld [vmem:[%s237 + $0x10] sm:$0xf]
        %v339 = vld [vmem:[%s237 + $0x14] sm:$0xf]
        %v340 = vld [vmem:[%s237 + $0x18] sm:$0xf]
        %v341 = vld [vmem:[%s237 + $0x1c] sm:$0xf]
        %v342 = vld [vmem:[%s237 + $0x20] sm:$0xf]
        %v343 = vld [vmem:[%s237 + $0x24] sm:$0xf]
        %v344 = vld [vmem:[%s237 + $0x28] sm:$0xf]
        %v345 = vld [vmem:[%s237 + $0x2c] sm:$0xf]
        %v346 = vld [vmem:[%s237 + $0x30] sm:$0xf]
        %v347 = vld [vmem:[%s237 + $0x34] sm:$0xf]
        %v348 = vld [vmem:[%s237 + $0x38] sm:$0xf]
        %v349 = vld [vmem:[%s237 + $0x3c] sm:$0xf]
        %v366 = vunpack.c.l.b16 %v334
        %v367 = vunpack.c.l.b16 %v335
        %v368 = vunpack.c.l.b16 %v336
        %v369 = vunpack.c.l.b16 %v337
        %v370 = vunpack.c.l.b16 %v338
        %v371 = vunpack.c.l.b16 %v339
        %v372 = vunpack.c.l.b16 %v340
        %v373 = vunpack.c.l.b16 %v341
        %v374 = vunpack.c.l.b16 %v342
        %v375 = vunpack.c.l.b16 %v343
        %v376 = vunpack.c.l.b16 %v344
        %v377 = vunpack.c.l.b16 %v345
        %v378 = vunpack.c.l.b16 %v346
        %v379 = vunpack.c.l.b16 %v347
        %v380 = vunpack.c.l.b16 %v348
        %v381 = vunpack.c.l.b16 %v349
        %v382 = vpack.c.b16 %v367, %v366
        %v383 = vpack.c.b16 %v369, %v368
        %v384 = vpack.c.b16 %v371, %v370
        %v385 = vpack.c.b16 %v373, %v372
        %v386 = vpack.c.b16 %v375, %v374
        %v387 = vpack.c.b16 %v377, %v376
        %v388 = vpack.c.b16 %v379, %v378
        %v389 = vpack.c.b16 %v381, %v380
        %v414 = vunpack.c.l.b16 %v302
        %v415 = vunpack.c.l.b16 %v303
        %v416 = vunpack.c.l.b16 %v304
        %v417 = vunpack.c.l.b16 %v305
        %v418 = vunpack.c.l.b16 %v306
        %v419 = vunpack.c.l.b16 %v307
        %v420 = vunpack.c.l.b16 %v308
        %v421 = vunpack.c.l.b16 %v309
        %v422 = vunpack.c.l.b16 %v310
        %v423 = vunpack.c.l.b16 %v311
        %v424 = vunpack.c.l.b16 %v312
        %v425 = vunpack.c.l.b16 %v313
        %v426 = vunpack.c.l.b16 %v314
        %v427 = vunpack.c.l.b16 %v315
        %v428 = vunpack.c.l.b16 %v316
        %v429 = vunpack.c.l.b16 %v317
        %v430 = vpack.c.b16 %v415, %v414
        %v431 = vpack.c.b16 %v417, %v416
        %v432 = vpack.c.b16 %v419, %v418
        %v433 = vpack.c.b16 %v421, %v420
        %v434 = vpack.c.b16 %v423, %v422
        %v435 = vpack.c.b16 %v425, %v424
        %v436 = vpack.c.b16 %v427, %v426
        %v437 = vpack.c.b16 %v429, %v428
        %446 = vmatprep.subr.bf16.mxu0 0
        %447 = vmatpush1.bf16.msra.mxu0 %v430
        %448 = vmatprep.subr.bf16.mxu0 0
        %449 = vmatpush1.bf16.msra.mxu0 %v431
        %450 = vmatprep.subr.bf16.mxu0 0
        %451 = vmatpush1.bf16.msra.mxu0 %v432
        %452 = vmatprep.subr.bf16.mxu0 0
        %453 = vmatpush1.bf16.msra.mxu0 %v433
        %454 = vmatprep.subr.bf16.mxu0 0
        %455 = vmatpush1.bf16.msra.mxu0 %v434
        %456 = vmatprep.subr.bf16.mxu0 0
        %457 = vmatpush1.bf16.msra.mxu0 %v435
        %458 = vmatprep.subr.bf16.mxu0 0
        %459 = vmatpush1.bf16.msra.mxu0 %v436
        %460 = vmatprep.subr.bf16.mxu0 0
        %461 = vmatpush1.bf16.msra.mxu0 %v437
        %462 = vmatprep.subr.bf16.mxu0 0
        %463 = vmatpush1.bf16.msra.mxu0 0
        %464 = vmatprep.subr.bf16.mxu0 0
        %465 = vmatpush1.bf16.msra.mxu0 0
        %466 = vmatprep.subr.bf16.mxu0 0
        %467 = vmatpush1.bf16.msra.mxu0 0
        %468 = vmatprep.subr.bf16.mxu0 0
        %469 = vmatpush1.bf16.msra.mxu0 0
        %470 = vmatprep.subr.bf16.mxu0 0
        %471 = vmatpush1.bf16.msra.mxu0 0
        %472 = vmatprep.subr.bf16.mxu0 0
        %473 = vmatpush1.bf16.msra.mxu0 0
        %474 = vmatprep.subr.bf16.mxu0 0
        %475 = vmatpush1.bf16.msra.mxu0 0
        %476 = vmatprep.subr.bf16.mxu0 0
        %477 = vmatpush1.bf16.msra.mxu0 0
        %478 = vmatprep.mubr.bf16.mxu0 0
        %479 = vmatmul.mubr.bf16.gmra.mrb[0].mxu0 %v382
        %v480 = vpop.f32.mrb[0].mxu0
        %v481 = vadd.f32 0.0, %v480
        %v482 = vpop.f32.mrb[0].mxu0
        %v483 = vpop.f32.mrb[0].mxu0
        %v484 = vadd.f32 0.0, %v483
        %v485 = vpop.f32.mrb[0].mxu0
        %486 = vmatprep.mubr.bf16.mxu0 0
        %487 = vmatmul.mubr.bf16.gmra.mrb[0].mxu0 %v383
        %v488 = vpop.f32.mrb[0].mxu0
        %v489 = vadd.f32 0.0, %v488
        %v490 = vpop.f32.mrb[0].mxu0
        %v491 = vpop.f32.mrb[0].mxu0
        %v492 = vadd.f32 0.0, %v491
        %v493 = vpop.f32.mrb[0].mxu0
        %494 = vmatprep.mubr.bf16.mxu0 0
        %495 = vmatmul.mubr.bf16.gmra.mrb[0].mxu0 %v384
        %v496 = vpop.f32.mrb[0].mxu0
        %v497 = vadd.f32 0.0, %v496
        %v498 = vpop.f32.mrb[0].mxu0
        %v499 = vpop.f32.mrb[0].mxu0
        %v500 = vadd.f32 0.0, %v499
        %v501 = vpop.f32.mrb[0].mxu0
        %502 = vmatprep.mubr.bf16.mxu0 0
        %503 = vmatmul.mubr.bf16.gmra.mrb[0].mxu0 %v385
        %v504 = vpop.f32.mrb[0].mxu0
        %v505 = vadd.f32 0.0, %v504
        %v506 = vpop.f32.mrb[0].mxu0
        %v507 = vpop.f32.mrb[0].mxu0
        %v508 = vadd.f32 0.0, %v507
        %v509 = vpop.f32.mrb[0].mxu0
        %510 = vmatprep.mubr.bf16.mxu0 0
        %511 = vmatmul.mubr.bf16.gmra.mrb[0].mxu0 %v386
        %v512 = vpop.f32.mrb[0].mxu0
        %v513 = vadd.f32 0.0, %v512
        %v514 = vpop.f32.mrb[0].mxu0
        %v515 = vpop.f32.mrb[0].mxu0
        %v516 = vadd.f32 0.0, %v515
        %v517 = vpop.f32.mrb[0].mxu0
        %518 = vmatprep.mubr.bf16.mxu0 0
        %519 = vmatmul.mubr.bf16.gmra.mrb[0].mxu0 %v387
        %v520 = vpop.f32.mrb[0].mxu0
        %v521 = vadd.f32 0.0, %v520
        %v522 = vpop.f32.mrb[0].mxu0
        %v523 = vpop.f32.mrb[0].mxu0
        %v524 = vadd.f32 0.0, %v523
        %v525 = vpop.f32.mrb[0].mxu0
        %526 = vmatprep.mubr.bf16.mxu0 0
        %527 = vmatmul.mubr.bf16.gmra.mrb[0].mxu0 %v388
        %v528 = vpop.f32.mrb[0].mxu0
        %v529 = vadd.f32 0.0, %v528
        %v530 = vpop.f32.mrb[0].mxu0
        %v531 = vpop.f32.mrb[0].mxu0
        %v532 = vadd.f32 0.0, %v531
        %v533 = vpop.f32.mrb[0].mxu0
        %534 = vmatprep.mubr.bf16.mxu0 0
        %535 = vmatmul.mubr.bf16.gmra.mrb[0].mxu0 %v389
        %v536 = vpop.f32.mrb[0].mxu0
        %v537 = vadd.f32 0.0, %v536
        %v538 = vpop.f32.mrb[0].mxu0
        %v539 = vpop.f32.mrb[0].mxu0
        %v540 = vadd.f32 0.0, %v539
        %v541 = vpop.f32.mrb[0].mxu0
        %542 = vdwg.mxu0
        %v543 = vadd.f32 %v318, %v481
        %v544 = vadd.f32 %v319, %v484
        %v545 = vadd.f32 %v320, %v489
        %v546 = vadd.f32 %v321, %v492
        %v547 = vadd.f32 %v322, %v497
        %v548 = vadd.f32 %v323, %v500
        %v549 = vadd.f32 %v324, %v505
        %v550 = vadd.f32 %v325, %v508
        %v551 = vadd.f32 %v326, %v513
        %v552 = vadd.f32 %v327, %v516
        %v553 = vadd.f32 %v328, %v521
        %v554 = vadd.f32 %v329, %v524
        %v555 = vadd.f32 %v330, %v529
        %v556 = vadd.f32 %v331, %v532
        %v557 = vadd.f32 %v332, %v537
        %v558 = vadd.f32 %v333, %v540
        %559 = vst [vmem:[#allocation2] sm:$0xff] %v543
        %560 = vst [vmem:[#allocation2 + $0x8] sm:$0xff] %v544
        %561 = vst [vmem:[#allocation2 + $0x10] sm:$0xff] %v545
        %562 = vst [vmem:[#allocation2 + $0x18] sm:$0xff] %v546
        %563 = vst [vmem:[#allocation2 + $0x20] sm:$0xff] %v547
        %564 = vst [vmem:[#allocation2 + $0x28] sm:$0xff] %v548
        %565 = vst [vmem:[#allocation2 + $0x30] sm:$0xff] %v549
        %566 = vst [vmem:[#allocation2 + $0x38] sm:$0xff] %v550
        %567 = vst [vmem:[#allocation2 + $0x40] sm:$0xff] %v551
        %568 = vst [vmem:[#allocation2 + $0x48] sm:$0xff] %v552
        %569 = vst [vmem:[#allocation2 + $0x50] sm:$0xff] %v553
        %570 = vst [vmem:[#allocation2 + $0x58] sm:$0xff] %v554
        %571 = vst [vmem:[#allocation2 + $0x60] sm:$0xff] %v555
        %572 = vst [vmem:[#allocation2 + $0x68] sm:$0xff] %v556
        %573 = vst [vmem:[#allocation2 + $0x70] sm:$0xff] %v557
        %574 = vst [vmem:[#allocation2 + $0x78] sm:$0xff] %v558
        %p575 = scmp.eq.s32.totalorder %s28, 1
        // Predicated region
        $region57: #{tpu_custom_call.1} parent=35 // pred_check
          %p576 = pneg %p575
        $region58: #{tpu_custom_call.1} parent=35 // pred_check_branch
          %578 = sbr.rel (%p576) target = $region60
        $region59: #{tpu_custom_call.1} parent=35 // pred_region
          %v579 = vld [vmem:[#allocation8] sm:$0x1]
          %v580 = vld [vmem:[#allocation8 + $0x1] sm:$0x1]
          %v581 = vld [vmem:[#allocation8 + $0x2] sm:$0x1]
          %v582 = vld [vmem:[#allocation2] sm:$0xff]
          %v583 = vld [vmem:[#allocation2 + $0x8] sm:$0xff]
          %v584 = vld [vmem:[#allocation2 + $0x10] sm:$0xff]
          %v585 = vld [vmem:[#allocation2 + $0x18] sm:$0xff]
          %v586 = vld [vmem:[#allocation2 + $0x20] sm:$0xff]
          %v587 = vld [vmem:[#allocation2 + $0x28] sm:$0xff]
          %v588 = vld [vmem:[#allocation2 + $0x30] sm:$0xff]
          %v589 = vld [vmem:[#allocation2 + $0x38] sm:$0xff]
          %v590 = vld [vmem:[#allocation2 + $0x40] sm:$0xff]
          %v591 = vld [vmem:[#allocation2 + $0x48] sm:$0xff]
          %v592 = vld [vmem:[#allocation2 + $0x50] sm:$0xff]
          %v593 = vld [vmem:[#allocation2 + $0x58] sm:$0xff]
          %v594 = vld [vmem:[#allocation2 + $0x60] sm:$0xff]
          %v595 = vld [vmem:[#allocation2 + $0x68] sm:$0xff]
          %v596 = vld [vmem:[#allocation2 + $0x70] sm:$0xff]
          %v597 = vld [vmem:[#allocation2 + $0x78] sm:$0xff]
          %v598 = vlaneseq
          %v599 = vshrl.u32 %v598, 7
          %v600 = vsub.s32 0, %v599
          %v601 = vrot.slane %v579, %v600
          %v602 = vadd.f32 %v582, %v601
          %v603 = vadd.f32 %v583, %v601
          %v604 = vadd.f32 %v584, %v601
          %v605 = vadd.f32 %v585, %v601
          %v606 = vadd.f32 %v586, %v601
          %v607 = vadd.f32 %v587, %v601
          %v608 = vadd.f32 %v588, %v601
          %v609 = vadd.f32 %v589, %v601
          %v610 = vadd.f32 %v590, %v601
          %v611 = vadd.f32 %v591, %v601
          %v612 = vadd.f32 %v592, %v601
          %v613 = vadd.f32 %v593, %v601
          %v614 = vadd.f32 %v594, %v601
          %v615 = vadd.f32 %v595, %v601
          %v616 = vadd.f32 %v596, %v601
          %v617 = vadd.f32 %v597, %v601
          %618 = vadd.xlane.f32.xlu0 %v602
          %v619 = vpop.xlane.xlu0 %618
          %620 = vadd.xlane.f32.xlu0 %v603
          %v621 = vpop.xlane.xlu0 %620
          %622 = vadd.xlane.f32.xlu0 %v604
          %v623 = vpop.xlane.xlu0 %622
          %624 = vadd.xlane.f32.xlu0 %v605
          %v625 = vpop.xlane.xlu0 %624
          %626 = vadd.xlane.f32.xlu0 %v606
          %v627 = vpop.xlane.xlu0 %626
          %628 = vadd.xlane.f32.xlu0 %v607
          %v629 = vpop.xlane.xlu0 %628
          %630 = vadd.xlane.f32.xlu0 %v608
          %v631 = vpop.xlane.xlu0 %630
          %632 = vadd.xlane.f32.xlu0 %v609
          %v633 = vpop.xlane.xlu0 %632
          %634 = vadd.xlane.f32.xlu0 %v610
          %v635 = vpop.xlane.xlu0 %634
          %636 = vadd.xlane.f32.xlu0 %v611
          %v637 = vpop.xlane.xlu0 %636
          %638 = vadd.xlane.f32.xlu0 %v612
          %v639 = vpop.xlane.xlu0 %638
          %640 = vadd.xlane.f32.xlu0 %v613
          %v641 = vpop.xlane.xlu0 %640
          %642 = vadd.xlane.f32.xlu0 %v614
          %v643 = vpop.xlane.xlu0 %642
          %644 = vadd.xlane.f32.xlu0 %v615
          %v645 = vpop.xlane.xlu0 %644
          %646 = vadd.xlane.f32.xlu0 %v616
          %v647 = vpop.xlane.xlu0 %646
          %648 = vadd.xlane.f32.xlu0 %v617
          %v649 = vpop.xlane.xlu0 %648
          %v650 = vmul.f32 %v619, 0.0078125
          %v651 = vmul.f32 %v621, 0.0078125
          %v652 = vmul.f32 %v623, 0.0078125
          %v653 = vmul.f32 %v625, 0.0078125
          %v654 = vmul.f32 %v627, 0.0078125
          %v655 = vmul.f32 %v629, 0.0078125
          %v656 = vmul.f32 %v631, 0.0078125
          %v657 = vmul.f32 %v633, 0.0078125
          %v658 = vmul.f32 %v635, 0.0078125
          %v659 = vmul.f32 %v637, 0.0078125
          %v660 = vmul.f32 %v639, 0.0078125
          %v661 = vmul.f32 %v641, 0.0078125
          %v662 = vmul.f32 %v643, 0.0078125
          %v663 = vmul.f32 %v645, 0.0078125
          %v664 = vmul.f32 %v647, 0.0078125
          %v665 = vmul.f32 %v649, 0.0078125
          %v666 = vsub.f32 %v602, %v650
          %v667 = vsub.f32 %v603, %v651
          %v668 = vsub.f32 %v604, %v652
          %v669 = vsub.f32 %v605, %v653
          %v670 = vsub.f32 %v606, %v654
          %v671 = vsub.f32 %v607, %v655
          %v672 = vsub.f32 %v608, %v656
          %v673 = vsub.f32 %v609, %v657
          %v674 = vsub.f32 %v610, %v658
          %v675 = vsub.f32 %v611, %v659
          %v676 = vsub.f32 %v612, %v660
          %v677 = vsub.f32 %v613, %v661
          %v678 = vsub.f32 %v614, %v662
          %v679 = vsub.f32 %v615, %v663
          %v680 = vsub.f32 %v616, %v664
          %v681 = vsub.f32 %v617, %v665
          %v682 = vmul.f32 %v666, %v666
          %v683 = vmul.f32 %v667, %v667
          %v684 = vmul.f32 %v668, %v668
          %v685 = vmul.f32 %v669, %v669
          %v686 = vmul.f32 %v670, %v670
          %v687 = vmul.f32 %v671, %v671
          %v688 = vmul.f32 %v672, %v672
          %v689 = vmul.f32 %v673, %v673
          %v690 = vmul.f32 %v674, %v674
          %v691 = vmul.f32 %v675, %v675
          %v692 = vmul.f32 %v676, %v676
          %v693 = vmul.f32 %v677, %v677
          %v694 = vmul.f32 %v678, %v678
          %v695 = vmul.f32 %v679, %v679
          %v696 = vmul.f32 %v680, %v680
          %v697 = vmul.f32 %v681, %v681
          %698 = vadd.xlane.f32.xlu0 %v682
          %v699 = vpop.xlane.xlu0 %698
          %700 = vadd.xlane.f32.xlu0 %v683
          %v701 = vpop.xlane.xlu0 %700
          %702 = vadd.xlane.f32.xlu0 %v684
          %v703 = vpop.xlane.xlu0 %702
          %704 = vadd.xlane.f32.xlu0 %v685
          %v705 = vpop.xlane.xlu0 %704
          %706 = vadd.xlane.f32.xlu0 %v686
          %v707 = vpop.xlane.xlu0 %706
          %708 = vadd.xlane.f32.xlu0 %v687
          %v709 = vpop.xlane.xlu0 %708
          %710 = vadd.xlane.f32.xlu0 %v688
          %v711 = vpop.xlane.xlu0 %710
          %712 = vadd.xlane.f32.xlu0 %v689
          %v713 = vpop.xlane.xlu0 %712
          %714 = vadd.xlane.f32.xlu0 %v690
          %v715 = vpop.xlane.xlu0 %714
          %716 = vadd.xlane.f32.xlu0 %v691
          %v717 = vpop.xlane.xlu0 %716
          %718 = vadd.xlane.f32.xlu0 %v692
          %v719 = vpop.xlane.xlu0 %718
          %720 = vadd.xlane.f32.xlu0 %v693
          %v721 = vpop.xlane.xlu0 %720
          %722 = vadd.xlane.f32.xlu0 %v694
          %v723 = vpop.xlane.xlu0 %722
          %724 = vadd.xlane.f32.xlu0 %v695
          %v725 = vpop.xlane.xlu0 %724
          %726 = vadd.xlane.f32.xlu0 %v696
          %v727 = vpop.xlane.xlu0 %726
          %728 = vadd.xlane.f32.xlu0 %v697
          %v729 = vpop.xlane.xlu0 %728
          %v730 = vmul.f32 %v699, 0.0078125
          %v731 = vmul.f32 %v701, 0.0078125
          %v732 = vmul.f32 %v703, 0.0078125
          %v733 = vmul.f32 %v705, 0.0078125
          %v734 = vmul.f32 %v707, 0.0078125
          %v735 = vmul.f32 %v709, 0.0078125
          %v736 = vmul.f32 %v711, 0.0078125
          %v737 = vmul.f32 %v713, 0.0078125
          %v738 = vmul.f32 %v715, 0.0078125
          %v739 = vmul.f32 %v717, 0.0078125
          %v740 = vmul.f32 %v719, 0.0078125
          %v741 = vmul.f32 %v721, 0.0078125
          %v742 = vmul.f32 %v723, 0.0078125
          %v743 = vmul.f32 %v725, 0.0078125
          %v744 = vmul.f32 %v727, 0.0078125
          %v745 = vmul.f32 %v729, 0.0078125
          %v746 = vadd.f32 %v730, 1e-05
          %v747 = vadd.f32 %v731, 1e-05
          %v748 = vadd.f32 %v732, 1e-05
          %v749 = vadd.f32 %v733, 1e-05
          %v750 = vadd.f32 %v734, 1e-05
          %v751 = vadd.f32 %v735, 1e-05
          %v752 = vadd.f32 %v736, 1e-05
          %v753 = vadd.f32 %v737, 1e-05
          %v754 = vadd.f32 %v738, 1e-05
          %v755 = vadd.f32 %v739, 1e-05
          %v756 = vadd.f32 %v740, 1e-05
          %v757 = vadd.f32 %v741, 1e-05
          %v758 = vadd.f32 %v742, 1e-05
          %v759 = vadd.f32 %v743, 1e-05
          %v760 = vadd.f32 %v744, 1e-05
          %v761 = vadd.f32 %v745, 1e-05
          %v762 = vrsqrt.pop %v746
          %v763 = vrsqrt.pop %v747
          %v764 = vrsqrt.pop %v748
          %v765 = vrsqrt.pop %v749
          %v766 = vrsqrt.pop %v750
          %v767 = vrsqrt.pop %v751
          %v768 = vrsqrt.pop %v752
          %v769 = vrsqrt.pop %v753
          %v770 = vrsqrt.pop %v754
          %v771 = vrsqrt.pop %v755
          %v772 = vrsqrt.pop %v756
          %v773 = vrsqrt.pop %v757
          %v774 = vrsqrt.pop %v758
          %v775 = vrsqrt.pop %v759
          %v776 = vrsqrt.pop %v760
          %v777 = vrsqrt.pop %v761
          %v778 = vmul.f32 %v666, %v762
          %v779 = vmul.f32 %v667, %v763
          %v780 = vmul.f32 %v668, %v764
          %v781 = vmul.f32 %v669, %v765
          %v782 = vmul.f32 %v670, %v766
          %v783 = vmul.f32 %v671, %v767
          %v784 = vmul.f32 %v672, %v768
          %v785 = vmul.f32 %v673, %v769
          %v786 = vmul.f32 %v674, %v770
          %v787 = vmul.f32 %v675, %v771
          %v788 = vmul.f32 %v676, %v772
          %v789 = vmul.f32 %v677, %v773
          %v790 = vmul.f32 %v678, %v774
          %v791 = vmul.f32 %v679, %v775
          %v792 = vmul.f32 %v680, %v776
          %v793 = vmul.f32 %v681, %v777
          %v794 = vlaneseq
          %v795 = vshrl.u32 %v794, 7
          %v796 = vsub.s32 0, %v795
          %v797 = vrot.slane %v580, %v796
          %v798 = vmul.f32 %v778, %v797
          %v799 = vmul.f32 %v779, %v797
          %v800 = vmul.f32 %v780, %v797
          %v801 = vmul.f32 %v781, %v797
          %v802 = vmul.f32 %v782, %v797
          %v803 = vmul.f32 %v783, %v797
          %v804 = vmul.f32 %v784, %v797
          %v805 = vmul.f32 %v785, %v797
          %v806 = vmul.f32 %v786, %v797
          %v807 = vmul.f32 %v787, %v797
          %v808 = vmul.f32 %v788, %v797
          %v809 = vmul.f32 %v789, %v797
          %v810 = vmul.f32 %v790, %v797
          %v811 = vmul.f32 %v791, %v797
          %v812 = vmul.f32 %v792, %v797
          %v813 = vmul.f32 %v793, %v797
          %v814 = vlaneseq
          %v815 = vshrl.u32 %v814, 7
          %v816 = vsub.s32 0, %v815
          %v817 = vrot.slane %v581, %v816
          %v818 = vadd.f32 %v798, %v817
          %v819 = vadd.f32 %v799, %v817
          %v820 = vadd.f32 %v800, %v817
          %v821 = vadd.f32 %v801, %v817
          %v822 = vadd.f32 %v802, %v817
          %v823 = vadd.f32 %v803, %v817
          %v824 = vadd.f32 %v804, %v817
          %v825 = vadd.f32 %v805, %v817
          %v826 = vadd.f32 %v806, %v817
          %v827 = vadd.f32 %v807, %v817
          %v828 = vadd.f32 %v808, %v817
          %v829 = vadd.f32 %v809, %v817
          %v830 = vadd.f32 %v810, %v817
          %v831 = vadd.f32 %v811, %v817
          %v832 = vadd.f32 %v812, %v817
          %v833 = vadd.f32 %v813, %v817
          %v834 = vmax.f32 %v818, 0.0
          %v835 = vmax.f32 %v819, 0.0
          %v836 = vmax.f32 %v820, 0.0
          %v837 = vmax.f32 %v821, 0.0
          %v838 = vmax.f32 %v822, 0.0
          %v839 = vmax.f32 %v823, 0.0
          %v840 = vmax.f32 %v824, 0.0
          %v841 = vmax.f32 %v825, 0.0
          %v842 = vmax.f32 %v826, 0.0
          %v843 = vmax.f32 %v827, 0.0
          %v844 = vmax.f32 %v828, 0.0
          %v845 = vmax.f32 %v829, 0.0
          %v846 = vmax.f32 %v830, 0.0
          %v847 = vmax.f32 %v831, 0.0
          %v848 = vmax.f32 %v832, 0.0
          %v849 = vmax.f32 %v833, 0.0
          %v850 = vpack.c.bf16 %v835, %v834
          %v851 = vpack.c.bf16 %v837, %v836
          %v852 = vpack.c.bf16 %v839, %v838
          %v853 = vpack.c.bf16 %v841, %v840
          %v854 = vpack.c.bf16 %v843, %v842
          %v855 = vpack.c.bf16 %v845, %v844
          %v856 = vpack.c.bf16 %v847, %v846
          %v857 = vpack.c.bf16 %v849, %v848
          %v858 = vld [vmem:[#allocation9] sm:$0xf]
          %v859 = vld [vmem:[#allocation9 + $0x4] sm:$0xf]
          %v860 = vld [vmem:[#allocation9 + $0x8] sm:$0xf]
          %v861 = vld [vmem:[#allocation9 + $0xc] sm:$0xf]
          %v862 = vld [vmem:[#allocation9 + $0x10] sm:$0xf]
          %v863 = vld [vmem:[#allocation9 + $0x14] sm:$0xf]
          %v864 = vld [vmem:[#allocation9 + $0x18] sm:$0xf]
          %v865 = vld [vmem:[#allocation9 + $0x1c] sm:$0xf]
          %v866 = vld [vmem:[#allocation9 + $0x20] sm:$0xf]
          %v867 = vld [vmem:[#allocation9 + $0x24] sm:$0xf]
          %v868 = vld [vmem:[#allocation9 + $0x28] sm:$0xf]
          %v869 = vld [vmem:[#allocation9 + $0x2c] sm:$0xf]
          %v870 = vld [vmem:[#allocation9 + $0x30] sm:$0xf]
          %v871 = vld [vmem:[#allocation9 + $0x34] sm:$0xf]
          %v872 = vld [vmem:[#allocation9 + $0x38] sm:$0xf]
          %v873 = vld [vmem:[#allocation9 + $0x3c] sm:$0xf]
          %v890 = vunpack.c.l.b16 %v858
          %v891 = vunpack.c.l.b16 %v859
          %v892 = vunpack.c.l.b16 %v860
          %v893 = vunpack.c.l.b16 %v861
          %v894 = vunpack.c.l.b16 %v862
          %v895 = vunpack.c.l.b16 %v863
          %v896 = vunpack.c.l.b16 %v864
          %v897 = vunpack.c.l.b16 %v865
          %v898 = vunpack.c.l.b16 %v866
          %v899 = vunpack.c.l.b16 %v867
          %v900 = vunpack.c.l.b16 %v868
          %v901 = vunpack.c.l.b16 %v869
          %v902 = vunpack.c.l.b16 %v870
          %v903 = vunpack.c.l.b16 %v871
          %v904 = vunpack.c.l.b16 %v872
          %v905 = vunpack.c.l.b16 %v873
          %v906 = vpack.c.b16 %v891, %v890
          %v907 = vpack.c.b16 %v893, %v892
          %v908 = vpack.c.b16 %v895, %v894
          %v909 = vpack.c.b16 %v897, %v896
          %v910 = vpack.c.b16 %v899, %v898
          %v911 = vpack.c.b16 %v901, %v900
          %v912 = vpack.c.b16 %v903, %v902
          %v913 = vpack.c.b16 %v905, %v904
          %922 = vmatprep.subr.bf16.mxu0 0
          %923 = vmatpush1.bf16.msra.mxu0 %v906
          %924 = vmatprep.subr.bf16.mxu0 0
          %925 = vmatpush1.bf16.msra.mxu0 %v907
          %926 = vmatprep.subr.bf16.mxu0 0
          %927 = vmatpush1.bf16.msra.mxu0 %v908
          %928 = vmatprep.subr.bf16.mxu0 0
          %929 = vmatpush1.bf16.msra.mxu0 %v909
          %930 = vmatprep.subr.bf16.mxu0 0
          %931 = vmatpush1.bf16.msra.mxu0 %v910
          %932 = vmatprep.subr.bf16.mxu0 0
          %933 = vmatpush1.bf16.msra.mxu0 %v911
          %934 = vmatprep.subr.bf16.mxu0 0
          %935 = vmatpush1.bf16.msra.mxu0 %v912
          %936 = vmatprep.subr.bf16.mxu0 0
          %937 = vmatpush1.bf16.msra.mxu0 %v913
          %938 = vmatprep.subr.bf16.mxu0 0
          %939 = vmatpush1.bf16.msra.mxu0 0
          %940 = vmatprep.subr.bf16.mxu0 0
          %941 = vmatpush1.bf16.msra.mxu0 0
          %942 = vmatprep.subr.bf16.mxu0 0
          %943 = vmatpush1.bf16.msra.mxu0 0
          %944 = vmatprep.subr.bf16.mxu0 0
          %945 = vmatpush1.bf16.msra.mxu0 0
          %946 = vmatprep.subr.bf16.mxu0 0
          %947 = vmatpush1.bf16.msra.mxu0 0
          %948 = vmatprep.subr.bf16.mxu0 0
          %949 = vmatpush1.bf16.msra.mxu0 0
          %950 = vmatprep.subr.bf16.mxu0 0
          %951 = vmatpush1.bf16.msra.mxu0 0
          %952 = vmatprep.subr.bf16.mxu0 0
          %953 = vmatpush1.bf16.msra.mxu0 0
          %954 = vmatprep.mubr.bf16.mxu0 0
          %955 = vmatmul.mubr.bf16.gmra.mrb[0].mxu0 %v850
          %v956 = vpop.f32.mrb[0].mxu0
          %v957 = vadd.f32 0.0, %v956
          %v958 = vpop.f32.mrb[0].mxu0
          %v959 = vpop.f32.mrb[0].mxu0
          %v960 = vadd.f32 0.0, %v959
          %v961 = vpop.f32.mrb[0].mxu0
          %962 = vmatprep.mubr.bf16.mxu0 0
          %963 = vmatmul.mubr.bf16.gmra.mrb[0].mxu0 %v851
          %v964 = vpop.f32.mrb[0].mxu0
          %v965 = vadd.f32 0.0, %v964
          %v966 = vpop.f32.mrb[0].mxu0
          %v967 = vpop.f32.mrb[0].mxu0
          %v968 = vadd.f32 0.0, %v967
          %v969 = vpop.f32.mrb[0].mxu0
          %970 = vmatprep.mubr.bf16.mxu0 0
          %971 = vmatmul.mubr.bf16.gmra.mrb[0].mxu0 %v852
          %v972 = vpop.f32.mrb[0].mxu0
          %v973 = vadd.f32 0.0, %v972
          %v974 = vpop.f32.mrb[0].mxu0
          %v975 = vpop.f32.mrb[0].mxu0
          %v976 = vadd.f32 0.0, %v975
          %v977 = vpop.f32.mrb[0].mxu0
          %978 = vmatprep.mubr.bf16.mxu0 0
          %979 = vmatmul.mubr.bf16.gmra.mrb[0].mxu0 %v853
          %v980 = vpop.f32.mrb[0].mxu0
          %v981 = vadd.f32 0.0, %v980
          %v982 = vpop.f32.mrb[0].mxu0
          %v983 = vpop.f32.mrb[0].mxu0
          %v984 = vadd.f32 0.0, %v983
          %v985 = vpop.f32.mrb[0].mxu0
          %986 = vmatprep.mubr.bf16.mxu0 0
          %987 = vmatmul.mubr.bf16.gmra.mrb[0].mxu0 %v854
          %v988 = vpop.f32.mrb[0].mxu0
          %v989 = vadd.f32 0.0, %v988
          %v990 = vpop.f32.mrb[0].mxu0
          %v991 = vpop.f32.mrb[0].mxu0
          %v992 = vadd.f32 0.0, %v991
          %v993 = vpop.f32.mrb[0].mxu0
          %994 = vmatprep.mubr.bf16.mxu0 0
          %995 = vmatmul.mubr.bf16.gmra.mrb[0].mxu0 %v855
          %v996 = vpop.f32.mrb[0].mxu0
          %v997 = vadd.f32 0.0, %v996
          %v998 = vpop.f32.mrb[0].mxu0
          %v999 = vpop.f32.mrb[0].mxu0
          %v1000 = vadd.f32 0.0, %v999
          %v1001 = vpop.f32.mrb[0].mxu0
          %1002 = vmatprep.mubr.bf16.mxu0 0
          %1003 = vmatmul.mubr.bf16.gmra.mrb[0].mxu0 %v856
          %v1004 = vpop.f32.mrb[0].mxu0
          %v1005 = vadd.f32 0.0, %v1004
          %v1006 = vpop.f32.mrb[0].mxu0
          %v1007 = vpop.f32.mrb[0].mxu0
          %v1008 = vadd.f32 0.0, %v1007
          %v1009 = vpop.f32.mrb[0].mxu0
          %1010 = vmatprep.mubr.bf16.mxu0 0
          %1011 = vmatmul.mubr.bf16.gmra.mrb[0].mxu0 %v857
          %v1012 = vpop.f32.mrb[0].mxu0
          %v1013 = vadd.f32 0.0, %v1012
          %v1014 = vpop.f32.mrb[0].mxu0
          %v1015 = vpop.f32.mrb[0].mxu0
          %v1016 = vadd.f32 0.0, %v1015
          %v1017 = vpop.f32.mrb[0].mxu0
          %1018 = vdwg.mxu0
          %v1019 = vpack.c.bf16 %v960, %v957
          %v1020 = vpack.c.bf16 %v968, %v965
          %v1021 = vpack.c.bf16 %v976, %v973
          %v1022 = vpack.c.bf16 %v984, %v981
          %v1023 = vpack.c.bf16 %v992, %v989
          %v1024 = vpack.c.bf16 %v1000, %v997
          %v1025 = vpack.c.bf16 %v1008, %v1005
          %v1026 = vpack.c.bf16 %v1016, %v1013
          %v1035 = vunpack.c.l.b16 %v1019
          %v1036 = vunpack.c.h.b16 %v1019
          %v1037 = vunpack.c.l.b16 %v1020
          %v1038 = vunpack.c.h.b16 %v1020
          %v1039 = vunpack.c.l.b16 %v1021
          %v1040 = vunpack.c.h.b16 %v1021
          %v1041 = vunpack.c.l.b16 %v1022
          %v1042 = vunpack.c.h.b16 %v1022
          %v1043 = vunpack.c.l.b16 %v1023
          %v1044 = vunpack.c.h.b16 %v1023
          %v1045 = vunpack.c.l.b16 %v1024
          %v1046 = vunpack.c.h.b16 %v1024
          %v1047 = vunpack.c.l.b16 %v1025
          %v1048 = vunpack.c.h.b16 %v1025
          %v1049 = vunpack.c.l.b16 %v1026
          %v1050 = vunpack.c.h.b16 %v1026
          %v1051 = vpack.c.b16 %v1035, %v1035
          %v1052 = vpack.c.b16 %v1036, %v1036
          %v1053 = vpack.c.b16 %v1037, %v1037
          %v1054 = vpack.c.b16 %v1038, %v1038
          %v1055 = vpack.c.b16 %v1039, %v1039
          %v1056 = vpack.c.b16 %v1040, %v1040
          %v1057 = vpack.c.b16 %v1041, %v1041
          %v1058 = vpack.c.b16 %v1042, %v1042
          %v1059 = vpack.c.b16 %v1043, %v1043
          %v1060 = vpack.c.b16 %v1044, %v1044
          %v1061 = vpack.c.b16 %v1045, %v1045
          %v1062 = vpack.c.b16 %v1046, %v1046
          %v1063 = vpack.c.b16 %v1047, %v1047
          %v1064 = vpack.c.b16 %v1048, %v1048
          %v1065 = vpack.c.b16 %v1049, %v1049
          %v1066 = vpack.c.b16 %v1050, %v1050
          %1083 = vst [vmem:[%s273] sm:$0xf] %v1051
          %1084 = vst [vmem:[%s273 + $0x4] sm:$0xf] %v1052
          %1085 = vst [vmem:[%s273 + $0x8] sm:$0xf] %v1053
          %1086 = vst [vmem:[%s273 + $0xc] sm:$0xf] %v1054
          %1087 = vst [vmem:[%s273 + $0x10] sm:$0xf] %v1055
          %1088 = vst [vmem:[%s273 + $0x14] sm:$0xf] %v1056
          %1089 = vst [vmem:[%s273 + $0x18] sm:$0xf] %v1057
          %1090 = vst [vmem:[%s273 + $0x1c] sm:$0xf] %v1058
          %1091 = vst [vmem:[%s273 + $0x20] sm:$0xf] %v1059
          %1092 = vst [vmem:[%s273 + $0x24] sm:$0xf] %v1060
          %1093 = vst [vmem:[%s273 + $0x28] sm:$0xf] %v1061
          %1094 = vst [vmem:[%s273 + $0x2c] sm:$0xf] %v1062
          %1095 = vst [vmem:[%s273 + $0x30] sm:$0xf] %v1063
          %1096 = vst [vmem:[%s273 + $0x34] sm:$0xf] %v1064
          %1097 = vst [vmem:[%s273 + $0x38] sm:$0xf] %v1065
          %1098 = vst [vmem:[%s273 + $0x3c] sm:$0xf] %v1066
        $region60: #{tpu_custom_call.1} parent=35 // pred_fallthru
          _
        %s1099 = sand.u32 %s134, 1
        %s1100 = scalar_lea.sflag [#allocation5], %s1099
        %s1101 = sand.u32 %s134, 1
        %s1102 = smul.addr %s1101, 64
        %s1103 = scalar_lea.vmem [#allocation11], %s1102
        // Predicated region
        $region61: #{tpu_custom_call.1} parent=35 // pred_check
          %p1104 = pneg %p144
        $region62: #{tpu_custom_call.1} parent=35 // pred_check_branch
          %1106 = sbr.rel (%p1104) target = $region64
        $region63: #{tpu_custom_call.1} parent=35 // pred_region
          %s1107 = smul.u32 16, %s27
          %s1109 = ssub.s32 1024, 1024
          %1110 = vsyncadd %s1100, %s1109
          %s1111 = smul.addr %s1107, 64
          %s1112 = scalar_lea.hbm %s4, %s1111
          %s1113 = sshll.u32 %s1103, 4
          %s1114 = int_to_ptr.vmem [resolvable:$true] %s1113
          %1119 = dma.vmem_to_hbm [thread:$0]  %s1114, 1024, %s1112, %s1100, 64, 64, 4
        $region64: #{tpu_custom_call.1} parent=35 // pred_fallthru
          _
      $region36: #{tpu_custom_call.1} parent=5 // pred_fallthru
        _
      %p1120 = scmp.le.s32.totalorder 2, %s18
      // Predicated region
      $region65: #{tpu_custom_call.1} parent=5 // pred_check
        %p1121 = pneg %p1120
      $region66: #{tpu_custom_call.1} parent=5 // pred_check_branch
        %1123 = sbr.rel (%p1121) target = $region68
      $region67: #{tpu_custom_call.1} parent=5 // pred_region
        %s1124 = ssub.s32 %s18, 2
        // Predicated region
        $region69: #{tpu_custom_call.1} parent=67 // pred_check
          %p1125 = pneg %p150
        $region70: #{tpu_custom_call.1} parent=67 // pred_check_branch
          %1127 = sbr.rel (%p1125) target = $region72
        $region71: #{tpu_custom_call.1} parent=67 // pred_region
          %s1128 = sand.u32 %s135, 1
          %s1129 = scalar_lea.sflag [#allocation5], %s1128
          %s1130 = sand.u32 %s135, 1
          %s1131 = smul.addr %s1130, 64
          %s1132 = scalar_lea.vmem [#allocation11], %s1131
          %1133 = dma.done %s1129, 1024
        $region72: #{tpu_custom_call.1} parent=67 // pred_fallthru
          _
      $region68: #{tpu_custom_call.1} parent=5 // pred_fallthru
        _
    $region6: #{tpu_custom_call.1} parent=1 // loop_footer
      %s22 = sadd.s32 1, %s18
    $region7: #{tpu_custom_call.1} parent=1 // loop_footer_branch
      %17 = sbr.rel target = $region3
    $region8: #{tpu_custom_call.1} parent=1 // loop_exit
      _
    %1134 = vsyncpa [#allocation4], 1
    %s1135 = scalar_lea.sflag [#allocation4], 1
    %1136 = vsyncpa %s1135, 1
    %1137 = vsyncpa [#allocation7], 1
    %1138 = vsyncpa [#allocation10], 1
    %1139 = vsyncpa [#allocation5], 1
    %s1140 = scalar_lea.sflag [#allocation5], 1
    %1141 = vsyncpa %s1140, 1

</llo_original>
